<compile_context>
chip_gen: v7x
topology: tpu7x:2x2x1
jax: 0.10.0
libtpu: 0.0.40
codegen_flags: <defaults>
</compile_context>

<pallas_src>
import functools

import jax
import jax.numpy as jnp
from jax.experimental import pallas as pl
from jax.experimental.pallas import tpu as pltpu


_COMPUTE_DTYPE = jnp.bfloat16   # MXU input dtype (accumulation stays float32)


def _round_up(x, m):
    return (x + m - 1) // m * m


# ---------------------------------------------------------------------------
# Fused MLP kernel:  one (tm, *) activation tile runs through all layers.
# ---------------------------------------------------------------------------

def _fused_mlp_kernel(x_ref, *refs, num_layers):
    """refs = (w0, b0, w1, b1, ..., w_{L-1}, b_{L-1}, o_ref)."""
    o_ref = refs[-1]
    h = x_ref[...]                                        # bf16 (tm, Kp0)
    for l in range(num_layers):                           # statically unrolled
        w = refs[2 * l][...]                              # bf16 (Kp_l, Np_l), VMEM-resident
        b = refs[2 * l + 1][...]                          # f32  (1, Np_l)
        y = jnp.dot(h, w, preferred_element_type=jnp.float32) + b
        if l < num_layers - 1:
            h = jnp.maximum(y, 0.0).astype(_COMPUTE_DTYPE)  # relu, back to bf16 for MXU
            # TODO(synk): training-mode F.dropout (stochastic) not implemented;
            # eval-mode dropout is the identity, so nothing to do here.
        else:
            e = jnp.exp(-y)                               # EUP
            h = pl.reciprocal(1.0 + e, approx=True)       # EUP; sigmoid in f32
    o_ref[...] = h.astype(o_ref.dtype)


@functools.partial(jax.jit, static_argnames=("num_layers", "tm", "vmem_limit"))
def _fused_mlp_padded(xp, *wbs, num_layers, tm, vmem_limit):
    Mp, Kp0 = xp.shape
    Np_last = wbs[-2].shape[1]

    in_specs = [pl.BlockSpec((tm, Kp0), lambda i: (i, 0))]       # activations, tiled over M
    for l in range(num_layers):
        Kp, Np = wbs[2 * l].shape
        in_specs.append(pl.BlockSpec((Kp, Np), lambda i: (0, 0)))  # weight: VMEM-resident
        in_specs.append(pl.BlockSpec((1, Np), lambda i: (0, 0)))   # bias:   VMEM-resident

    return pl.pallas_call(
        functools.partial(_fused_mlp_kernel, num_layers=num_layers),
        out_shape=jax.ShapeDtypeStruct((Mp, Np_last), jnp.float32),
        grid_spec=pltpu.PrefetchScalarGridSpec(
            num_scalar_prefetch=0,
            grid=(Mp // tm,),
            in_specs=in_specs,
            out_specs=pl.BlockSpec((tm, Np_last), lambda i: (i, 0)),
        ),
        compiler_params=pltpu.CompilerParams(
            dimension_semantics=("parallel",),     # M tiles shard across v7x's 2 TCs
            vmem_limit_bytes=vmem_limit),
    )(xp, *wbs)


def _bucket_rows(m):
    """Bucket M so variable batch sizes don't retrace per distinct M."""
    if m <= 128:
        return 128
    if m <= 512:
        return _round_up(m, 128)
    return _round_up(m, 256)


def _pick_tm(mp):
    """Pick tm (multiple of 16 for bf16) so the M grid has >=2 tiles when possible."""
    if mp <= 128:
        return mp
    if mp < 512:
        return 128
    return 256


def _fused_vmem_limit(tm, kp0, layer_shapes, np_last):
    """Scoped-VMEM budget from actual resident bytes (capped below v7x 64 MiB)."""
    need = 2 * tm * kp0 * 2                               # bf16 x tile, double-buffered
    for kp, np_ in layer_shapes:
        need += 2 * (kp * np_ * 2 + np_ * 4)              # resident bf16 W + f32 b
    need += 2 * tm * np_last * 4                          # f32 out tile, double-buffered
    max_np = max(np_ for _, np_ in layer_shapes)
    need += 4 * tm * max_np * 4                           # in-kernel activation headroom
    return int(min(max(2 * need, 16 * 1024 * 1024), 48 * 1024 * 1024))


# ---------------------------------------------------------------------------
# Parameters (PyTorch nn.Linear default init) and the module port
# ---------------------------------------------------------------------------

def _linear_params(key, in_features, out_features):
    kw, kb = jax.random.split(key)
    bound = 1.0 / (in_features ** 0.5)
    w = jax.random.uniform(kw, (in_features, out_features), jnp.float32, -bound, bound)
    b = jax.random.uniform(kb, (out_features,), jnp.float32, -bound, bound)
    # One-time pad to 128-multiples and cast to bf16 (documented precision choice:
    # kernel accuracy is bf16-weight accuracy; accumulation/epilogue are f32).
    kp = _round_up(in_features, 128)
    np_ = _round_up(out_features, 128)
    wp = jnp.pad(w, ((0, kp - in_features), (0, np_ - out_features))).astype(_COMPUTE_DTYPE)
    bp = jnp.pad(b, (0, np_ - out_features)).reshape(1, np_).astype(jnp.float32)
    return {"w": w, "b": b, "w_padded": wp, "b_padded": bp,
            "in_features": in_features, "out_features": out_features}


class MlpVisionDecoder:
    """JAX/Pallas port of the PyTorch mlp_vision_decoder module (inference mode).

    Assumes all (padded) layer weights fit in VMEM simultaneously, which holds
    for MLP-decoder-sized hidden dims.
    """

    def __init__(self, key, in_channels, hidden_channels, out_channels,
                 num_layers, dropout):
        self.dropout = dropout
        if num_layers == 1:
            dims = [(in_channels, out_channels)]
        else:
            dims = [(in_channels, hidden_channels)]
            dims += [(hidden_channels, hidden_channels)] * (num_layers - 2)
            dims += [(hidden_channels, out_channels)]
        self.layers = []
        for cin, cout in dims:
            key, k = jax.random.split(key)
            self.layers.append(_linear_params(k, cin, cout))

    def forward(self, x_i):
        M, K = x_i.shape
        kp0 = self.layers[0]["w_padded"].shape[0]
        mp = _bucket_rows(M)
        tm = _pick_tm(mp)

        # Single pad+cast pass over the activation slab (the only per-forward
        # XLA preprocessing); everything else happens inside one pallas_call.
        xp = jnp.pad(x_i.astype(jnp.float32),
                     ((0, mp - M), (0, kp0 - K))).astype(_COMPUTE_DTYPE)

        wbs, layer_shapes = [], []
        for layer in self.layers:
            wbs += [layer["w_padded"], layer["b_padded"]]
            layer_shapes.append(layer["w_padded"].shape)
        np_last = layer_shapes[-1][1]

        out = _fused_mlp_padded(
            xp, *wbs,
            num_layers=len(self.layers), tm=tm,
            vmem_limit=_fused_vmem_limit(tm, kp0, layer_shapes, np_last))

        N = self.layers[-1]["out_features"]
        return out[:M, :N]

    __call__ = forward


def reference_forward(model, x):
    """Pure-JAX f32 reference for correctness checking."""
    h = x.astype(jnp.float32)
    for layer in model.layers[:-1]:
        h = jnp.maximum(h @ layer["w"] + layer["b"], 0.0)
    last = model.layers[-1]
    return jax.nn.sigmoid(h @ last["w"] + last["b"])


if __name__ == "__main__":
    key = jax.random.PRNGKey(0)
    pkey, xkey = jax.random.split(key)

    in_channels, hidden_channels, out_channels = 32, 64, 16
    num_layers, dropout = 3, 0.5

    model = MlpVisionDecoder(pkey, in_channels, hidden_channels, out_channels,
                             num_layers, dropout)
    x = jax.random.normal(xkey, (16, in_channels), dtype=jnp.float32)

    out = model(x)
    out = jax.block_until_ready(out)

    assert out.shape == (16, out_channels), out.shape
    assert out.dtype == jnp.float32
    assert bool(jnp.all(jnp.isfinite(out)))
    assert bool(jnp.all((out >= 0.0) & (out <= 1.0)))

    ref = reference_forward(model, x)
    assert bool(jnp.allclose(out, ref, rtol=3e-2, atol=3e-2)), \
        float(jnp.max(jnp.abs(out - ref)))

    print("KERNEL_OK")
</pallas_src>

<mosaic_0001>
module attributes {stable_mosaic.version = 11 : i64} {
  func.func @_fused_mlp_kernel(%arg0: i32, %arg1: memref<128x128xbf16, #tpu.memory_space<vmem>>, %arg2: memref<128x128xbf16, #tpu.memory_space<vmem>>, %arg3: memref<1x128xf32, #tpu.memory_space<vmem>>, %arg4: memref<128x128xbf16, #tpu.memory_space<vmem>>, %arg5: memref<1x128xf32, #tpu.memory_space<vmem>>, %arg6: memref<128x128xbf16, #tpu.memory_space<vmem>>, %arg7: memref<1x128xf32, #tpu.memory_space<vmem>>, %arg8: memref<128x128xf32, #tpu.memory_space<vmem>>) attributes {dimension_semantics = [#tpu.dimension_semantics<parallel>], iteration_bounds = array<i64: 1>, scalar_prefetch = 0 : i64, scratch_operands = 0 : i64, tpu.core_type = #tpu.core_type<tc>, window_params = [{transform_indices = @transform_0, window_bounds = array<i64: 128, 128>}, {pipeline_mode = #tpu.pipeline_mode<synchronous>, transform_indices = @transform_1, window_bounds = array<i64: 128, 128>}, {pipeline_mode = #tpu.pipeline_mode<synchronous>, transform_indices = @transform_2, window_bounds = array<i64: 1, 128>}, {pipeline_mode = #tpu.pipeline_mode<synchronous>, transform_indices = @transform_3, window_bounds = array<i64: 128, 128>}, {pipeline_mode = #tpu.pipeline_mode<synchronous>, transform_indices = @transform_4, window_bounds = array<i64: 1, 128>}, {pipeline_mode = #tpu.pipeline_mode<synchronous>, transform_indices = @transform_5, window_bounds = array<i64: 128, 128>}, {pipeline_mode = #tpu.pipeline_mode<synchronous>, transform_indices = @transform_6, window_bounds = array<i64: 1, 128>}, {transform_indices = @transform_7, window_bounds = array<i64: 128, 128>}]} {
    %c0 = arith.constant 0 : index
    %c0_0 = arith.constant 0 : index
    %0 = vector.load %arg1[%c0, %c0_0] : memref<128x128xbf16, #tpu.memory_space<vmem>>, vector<128x128xbf16>
    %c0_1 = arith.constant 0 : index
    %c0_2 = arith.constant 0 : index
    %1 = vector.load %arg2[%c0_1, %c0_2] : memref<128x128xbf16, #tpu.memory_space<vmem>>, vector<128x128xbf16>
    %c0_3 = arith.constant 0 : index
    %c0_4 = arith.constant 0 : index
    %2 = vector.load %arg3[%c0_3, %c0_4] : memref<1x128xf32, #tpu.memory_space<vmem>>, vector<1x128xf32>
    %cst = arith.constant dense<0.000000e+00> : vector<128x128xf32>
    %3 = tpu.matmul %0, %1, %cst {dimension_numbers = #tpu.dot_dimension_numbers<[1], [0], [0], [1], [0, 0, 1, 1], [], []>} : vector<128x128xbf16>, vector<128x128xbf16>, vector<128x128xf32> -> vector<128x128xf32>
    %4 = vector.broadcast %2 : vector<1x128xf32> to vector<128x128xf32>
    %5 = arith.addf %3, %4 : vector<128x128xf32>
    %cst_5 = arith.constant 0.000000e+00 : f32
    %6 = vector.broadcast %cst_5 : f32 to vector<128x128xf32>
    %7 = arith.maximumf %5, %6 : vector<128x128xf32>
    %8 = arith.truncf %7 : vector<128x128xf32> to vector<128x128xbf16>
    %c0_6 = arith.constant 0 : index
    %c0_7 = arith.constant 0 : index
    %9 = vector.load %arg4[%c0_6, %c0_7] : memref<128x128xbf16, #tpu.memory_space<vmem>>, vector<128x128xbf16>
    %c0_8 = arith.constant 0 : index
    %c0_9 = arith.constant 0 : index
    %10 = vector.load %arg5[%c0_8, %c0_9] : memref<1x128xf32, #tpu.memory_space<vmem>>, vector<1x128xf32>
    %cst_10 = arith.constant dense<0.000000e+00> : vector<128x128xf32>
    %11 = tpu.matmul %8, %9, %cst_10 {dimension_numbers = #tpu.dot_dimension_numbers<[1], [0], [0], [1], [0, 0, 1, 1], [], []>} : vector<128x128xbf16>, vector<128x128xbf16>, vector<128x128xf32> -> vector<128x128xf32>
    %12 = vector.broadcast %10 : vector<1x128xf32> to vector<128x128xf32>
    %13 = arith.addf %11, %12 : vector<128x128xf32>
    %cst_11 = arith.constant 0.000000e+00 : f32
    %14 = vector.broadcast %cst_11 : f32 to vector<128x128xf32>
    %15 = arith.maximumf %13, %14 : vector<128x128xf32>
    %16 = arith.truncf %15 : vector<128x128xf32> to vector<128x128xbf16>
    %c0_12 = arith.constant 0 : index
    %c0_13 = arith.constant 0 : index
    %17 = vector.load %arg6[%c0_12, %c0_13] : memref<128x128xbf16, #tpu.memory_space<vmem>>, vector<128x128xbf16>
    %c0_14 = arith.constant 0 : index
    %c0_15 = arith.constant 0 : index
    %18 = vector.load %arg7[%c0_14, %c0_15] : memref<1x128xf32, #tpu.memory_space<vmem>>, vector<1x128xf32>
    %cst_16 = arith.constant dense<0.000000e+00> : vector<128x128xf32>
    %19 = tpu.matmul %16, %17, %cst_16 {dimension_numbers = #tpu.dot_dimension_numbers<[1], [0], [0], [1], [0, 0, 1, 1], [], []>} : vector<128x128xbf16>, vector<128x128xbf16>, vector<128x128xf32> -> vector<128x128xf32>
    %20 = vector.broadcast %18 : vector<1x128xf32> to vector<128x128xf32>
    %21 = arith.addf %19, %20 : vector<128x128xf32>
    %cst_17 = arith.constant 0.000000e+00 : f32
    %22 = vector.broadcast %cst_17 : f32 to vector<128x128xf32>
    %23 = arith.subf %22, %21 : vector<128x128xf32>
    %24 = math.exp %23 : vector<128x128xf32>
    %cst_18 = arith.constant 1.000000e+00 : f32
    %25 = vector.broadcast %cst_18 : f32 to vector<128x128xf32>
    %26 = arith.addf %25, %24 : vector<128x128xf32>
    %27 = tpu.reciprocal %26 {approx = true} : vector<128x128xf32> -> vector<128x128xf32>
    %c0_19 = arith.constant 0 : index
    %c0_20 = arith.constant 0 : index
    %28 = vector.load %arg8[%c0_19, %c0_20] : memref<128x128xf32, #tpu.memory_space<vmem>>, vector<128x128xf32>
    tpu.vector_store %arg8[%c0_19, %c0_20], %27 {strides = array<i32>} : memref<128x128xf32, #tpu.memory_space<vmem>>, vector<128x128xf32>,
    return
  }
  func.func @transform_0(%arg0: i32) -> (i32, i32) {
    %c0_i32 = arith.constant 0 : i32
    %c0_i32_0 = arith.constant 0 : i32
    return %arg0, %c0_i32 : i32, i32
  }
  func.func @transform_1(%arg0: i32) -> (i32, i32) {
    %c0_i32 = arith.constant 0 : i32
    %c0_i32_0 = arith.constant 0 : i32
    %c0_i32_1 = arith.constant 0 : i32
    return %c0_i32, %c0_i32_0 : i32, i32
  }
  func.func @transform_2(%arg0: i32) -> (i32, i32) {
    %c0_i32 = arith.constant 0 : i32
    %c0_i32_0 = arith.constant 0 : i32
    %c0_i32_1 = arith.constant 0 : i32
    return %c0_i32, %c0_i32_0 : i32, i32
  }
  func.func @transform_3(%arg0: i32) -> (i32, i32) {
    %c0_i32 = arith.constant 0 : i32
    %c0_i32_0 = arith.constant 0 : i32
    %c0_i32_1 = arith.constant 0 : i32
    return %c0_i32, %c0_i32_0 : i32, i32
  }
  func.func @transform_4(%arg0: i32) -> (i32, i32) {
    %c0_i32 = arith.constant 0 : i32
    %c0_i32_0 = arith.constant 0 : i32
    %c0_i32_1 = arith.constant 0 : i32
    return %c0_i32, %c0_i32_0 : i32, i32
  }
  func.func @transform_5(%arg0: i32) -> (i32, i32) {
    %c0_i32 = arith.constant 0 : i32
    %c0_i32_0 = arith.constant 0 : i32
    %c0_i32_1 = arith.constant 0 : i32
    return %c0_i32, %c0_i32_0 : i32, i32
  }
  func.func @transform_6(%arg0: i32) -> (i32, i32) {
    %c0_i32 = arith.constant 0 : i32
    %c0_i32_0 = arith.constant 0 : i32
    %c0_i32_1 = arith.constant 0 : i32
    return %c0_i32, %c0_i32_0 : i32, i32
  }
  func.func @transform_7(%arg0: i32) -> (i32, i32) {
    %c0_i32 = arith.constant 0 : i32
    %c0_i32_0 = arith.constant 0 : i32
    return %arg0, %c0_i32 : i32, i32
  }
}

</mosaic_0001>

<llo_original>
// kernel: _fused_mlp_padded.1
$region0: #{_fused_mlp_padded.1}
  #allocation0 [shape = 'u32[]', space=smem, size = 0x4, offset = 0x4, fixed_abs, tag = 'smem constant byte address 0x4 - core index']
  #allocation1 [shape = 'u32[144,128]{1,0:T(1,128)}', space=vmem, size = 0x12000, scoped, tag = 'internal scratch']
  %s0 = inlined_call_operand.hbm [shape: bf16[128,128], index: 0, kind: input, shape index: {}]
  %s1 = inlined_call_operand.hbm [shape: bf16[128,128], index: 1, kind: input, shape index: {}]
  %s2 = inlined_call_operand.vmem [shape: f32[1,128], index: 2, kind: input, shape index: {}]
  %s3 = inlined_call_operand.hbm [shape: bf16[128,128], index: 3, kind: input, shape index: {}]
  %s4 = inlined_call_operand.vmem [shape: f32[1,128], index: 4, kind: input, shape index: {}]
  %s5 = inlined_call_operand.hbm [shape: bf16[128,128], index: 5, kind: input, shape index: {}]
  %s6 = inlined_call_operand.vmem [shape: f32[1,128], index: 6, kind: input, shape index: {}]
  %s7 = inlined_call_operand.hbm [shape: f32[128,128], index: 7, kind: output, shape index: {}]
  %s8 = sld [smem:[#allocation0]]
  $region54: #{_fused_mlp_padded.1} parent=0
    _
  %s10 = ssub.s32 1, %s8
  %s11 = scalar_select 0, %s10, %s8
  $region1: #{_fused_mlp_padded.1} parent=0
    #allocation2 [shape = 'u8[32768]{0}', space=vmem, size = 0x8000, scoped, tag = 'input window, operand 0, single buffered']
    #allocation3 [shape = 's32[1]{0}', space=sflag, size = 0x4, scoped, tag = 'scoped memory for _fused_mlp_padded.1']
    #allocation4 [shape = 's32[1]{0}', space=sflag, size = 0x4, scoped, tag = 'scoped memory for _fused_mlp_padded.1']
    #allocation5 [shape = 'u8[32768]{0}', space=vmem, size = 0x8000, scoped, tag = 'input window, operand 1, single buffered']
    #allocation6 [shape = 's32[1]{0}', space=sflag, size = 0x4, scoped, tag = 'scoped memory for _fused_mlp_padded.1']
    #allocation7 [shape = 'u8[32768]{0}', space=vmem, size = 0x8000, scoped, tag = 'input window, operand 3, single buffered']
    #allocation8 [shape = 'u8[32768]{0}', space=vmem, size = 0x8000, scoped, tag = 'input window, operand 5, single buffered']
    #allocation9 [shape = 's32[1]{0}', space=sflag, size = 0x4, scoped, tag = 'scoped memory for _fused_mlp_padded.1']
    #allocation10 [shape = 'u8[65536]{0}', space=vmem, size = 0x10000, scoped, tag = 'output window, operand 0, single buffered']
    %12 = vsyncpa [#allocation3], 0
    %13 = vsyncpa [#allocation6], 0
    %14 = vsyncpa [#allocation9], 0
    %15 = vsyncpa [#allocation4], 0
    // Predicated region
    $region2: #{_fused_mlp_padded.1} parent=1 // pred_check
      _
    $region3: #{_fused_mlp_padded.1} parent=1 // pred_check_branch
      %17 = sbr.rel (0) target = $region5
    $region4: #{_fused_mlp_padded.1} parent=1 // pred_region
      %s19 = ssub.s32 1024, 1024
      %20 = vsyncadd [#allocation3], %s19
      %s21 = sshll.u32 [#allocation2], 4
      %s22 = int_to_ptr.vmem [resolvable:$true] %s21
      %27 = dma.hbm_to_vmem [thread:$0]  %s0, 1024, %s22, [#allocation3], 64, 64, 4
    $region5: #{_fused_mlp_padded.1} parent=1 // pred_fallthru
      _
    // Predicated region
    $region6: #{_fused_mlp_padded.1} parent=1 // pred_check
      _
    $region7: #{_fused_mlp_padded.1} parent=1 // pred_check_branch
      %29 = sbr.rel (0) target = $region9
    $region8: #{_fused_mlp_padded.1} parent=1 // pred_region
      %s31 = ssub.s32 1024, 1024
      %32 = vsyncadd [#allocation6], %s31
      %s33 = sshll.u32 [#allocation5], 4
      %s34 = int_to_ptr.vmem [resolvable:$true] %s33
      %39 = dma.hbm_to_vmem [thread:$0]  %s1, 1024, %s34, [#allocation6], 64, 64, 4
    $region9: #{_fused_mlp_padded.1} parent=1 // pred_fallthru
      _
    // Predicated region
    $region10: #{_fused_mlp_padded.1} parent=1 // pred_check
      _
    $region11: #{_fused_mlp_padded.1} parent=1 // pred_check_branch
      %41 = sbr.rel (0) target = $region13
    $region12: #{_fused_mlp_padded.1} parent=1 // pred_region
      _
    $region13: #{_fused_mlp_padded.1} parent=1 // pred_fallthru
      _
    // Predicated region
    $region14: #{_fused_mlp_padded.1} parent=1 // pred_check
      _
    $region15: #{_fused_mlp_padded.1} parent=1 // pred_check_branch
      %43 = sbr.rel (0) target = $region17
    $region16: #{_fused_mlp_padded.1} parent=1 // pred_region
      %s45 = ssub.s32 1024, 1024
      %46 = vsyncadd [#allocation6], %s45
      %s47 = sshll.u32 [#allocation7], 4
      %s48 = int_to_ptr.vmem [resolvable:$true] %s47
      %53 = dma.hbm_to_vmem [thread:$0]  %s3, 1024, %s48, [#allocation6], 64, 64, 4
    $region17: #{_fused_mlp_padded.1} parent=1 // pred_fallthru
      _
    // Predicated region
    $region18: #{_fused_mlp_padded.1} parent=1 // pred_check
      _
    $region19: #{_fused_mlp_padded.1} parent=1 // pred_check_branch
      %55 = sbr.rel (0) target = $region21
    $region20: #{_fused_mlp_padded.1} parent=1 // pred_region
      _
    $region21: #{_fused_mlp_padded.1} parent=1 // pred_fallthru
      _
    // Predicated region
    $region22: #{_fused_mlp_padded.1} parent=1 // pred_check
      _
    $region23: #{_fused_mlp_padded.1} parent=1 // pred_check_branch
      %57 = sbr.rel (0) target = $region25
    $region24: #{_fused_mlp_padded.1} parent=1 // pred_region
      %s59 = ssub.s32 1024, 1024
      %60 = vsyncadd [#allocation9], %s59
      %s61 = sshll.u32 [#allocation8], 4
      %s62 = int_to_ptr.vmem [resolvable:$true] %s61
      %67 = dma.hbm_to_vmem [thread:$0]  %s5, 1024, %s62, [#allocation9], 64, 64, 4
    $region25: #{_fused_mlp_padded.1} parent=1 // pred_fallthru
      _
    // Predicated region
    $region26: #{_fused_mlp_padded.1} parent=1 // pred_check
      _
    $region27: #{_fused_mlp_padded.1} parent=1 // pred_check_branch
      %69 = sbr.rel (0) target = $region29
    $region28: #{_fused_mlp_padded.1} parent=1 // pred_region
      _
    $region29: #{_fused_mlp_padded.1} parent=1 // pred_fallthru
      _
    // Predicated region
    $region30: #{_fused_mlp_padded.1} parent=1 // pred_check
      _
    $region31: #{_fused_mlp_padded.1} parent=1 // pred_check_branch
      %71 = sbr.rel (0) target = $region33
    $region32: #{_fused_mlp_padded.1} parent=1 // pred_region
      %72 = dma.done [#allocation3], 1024
    $region33: #{_fused_mlp_padded.1} parent=1 // pred_fallthru
      _
    // Predicated region
    $region34: #{_fused_mlp_padded.1} parent=1 // pred_check
      _
    $region35: #{_fused_mlp_padded.1} parent=1 // pred_check_branch
      %74 = sbr.rel (0) target = $region37
    $region36: #{_fused_mlp_padded.1} parent=1 // pred_region
      %75 = dma.done [#allocation6], 1024
    $region37: #{_fused_mlp_padded.1} parent=1 // pred_fallthru
      _
    // Predicated region
    $region38: #{_fused_mlp_padded.1} parent=1 // pred_check
      _
    $region39: #{_fused_mlp_padded.1} parent=1 // pred_check_branch
      %77 = sbr.rel (0) target = $region41
    $region40: #{_fused_mlp_padded.1} parent=1 // pred_region
      %78 = dma.done [#allocation6], 1024
    $region41: #{_fused_mlp_padded.1} parent=1 // pred_fallthru
      _
    // Predicated region
    $region42: #{_fused_mlp_padded.1} parent=1 // pred_check
      _
    $region43: #{_fused_mlp_padded.1} parent=1 // pred_check_branch
      %80 = sbr.rel (0) target = $region45
    $region44: #{_fused_mlp_padded.1} parent=1 // pred_region
      %81 = dma.done [#allocation9], 1024
    $region45: #{_fused_mlp_padded.1} parent=1 // pred_fallthru
      _
    %v83 = vld [vmem:[#allocation2] sm:$0xf]
    %v84 = vld [vmem:[#allocation2 + $0x4] sm:$0xf]
    %v85 = vld [vmem:[#allocation2 + $0x8] sm:$0xf]
    %v86 = vld [vmem:[#allocation2 + $0xc] sm:$0xf]
    %v87 = vld [vmem:[#allocation2 + $0x10] sm:$0xf]
    %v88 = vld [vmem:[#allocation2 + $0x14] sm:$0xf]
    %v89 = vld [vmem:[#allocation2 + $0x18] sm:$0xf]
    %v90 = vld [vmem:[#allocation2 + $0x1c] sm:$0xf]
    %v91 = vld [vmem:[#allocation2 + $0x20] sm:$0xf]
    %v92 = vld [vmem:[#allocation2 + $0x24] sm:$0xf]
    %v93 = vld [vmem:[#allocation2 + $0x28] sm:$0xf]
    %v94 = vld [vmem:[#allocation2 + $0x2c] sm:$0xf]
    %v95 = vld [vmem:[#allocation2 + $0x30] sm:$0xf]
    %v96 = vld [vmem:[#allocation2 + $0x34] sm:$0xf]
    %v97 = vld [vmem:[#allocation2 + $0x38] sm:$0xf]
    %v98 = vld [vmem:[#allocation2 + $0x3c] sm:$0xf]
    %v99 = vld [vmem:[#allocation5] sm:$0xf]
    %v100 = vld [vmem:[#allocation5 + $0x4] sm:$0xf]
    %v101 = vld [vmem:[#allocation5 + $0x8] sm:$0xf]
    %v102 = vld [vmem:[#allocation5 + $0xc] sm:$0xf]
    %v103 = vld [vmem:[#allocation5 + $0x10] sm:$0xf]
    %v104 = vld [vmem:[#allocation5 + $0x14] sm:$0xf]
    %v105 = vld [vmem:[#allocation5 + $0x18] sm:$0xf]
    %v106 = vld [vmem:[#allocation5 + $0x1c] sm:$0xf]
    %v107 = vld [vmem:[#allocation5 + $0x20] sm:$0xf]
    %v108 = vld [vmem:[#allocation5 + $0x24] sm:$0xf]
    %v109 = vld [vmem:[#allocation5 + $0x28] sm:$0xf]
    %v110 = vld [vmem:[#allocation5 + $0x2c] sm:$0xf]
    %v111 = vld [vmem:[#allocation5 + $0x30] sm:$0xf]
    %v112 = vld [vmem:[#allocation5 + $0x34] sm:$0xf]
    %v113 = vld [vmem:[#allocation5 + $0x38] sm:$0xf]
    %v114 = vld [vmem:[#allocation5 + $0x3c] sm:$0xf]
    %v115 = vld [vmem:[%s2] sm:$0x1]
    %v117 = vlaneseq
    %v118 = vshrl.u32 %v117, 7
    %v119 = vsub.s32 0, %v118
    %v120 = vrot.slane %v115, %v119
    %v138 = vunpack.c.l.b16 %v83
    %v139 = vunpack.c.l.b16 %v84
    %v140 = vunpack.c.l.b16 %v85
    %v141 = vunpack.c.l.b16 %v86
    %v142 = vunpack.c.l.b16 %v87
    %v143 = vunpack.c.l.b16 %v88
    %v144 = vunpack.c.l.b16 %v89
    %v145 = vunpack.c.l.b16 %v90
    %v146 = vunpack.c.l.b16 %v91
    %v147 = vunpack.c.l.b16 %v92
    %v148 = vunpack.c.l.b16 %v93
    %v149 = vunpack.c.l.b16 %v94
    %v150 = vunpack.c.l.b16 %v95
    %v151 = vunpack.c.l.b16 %v96
    %v152 = vunpack.c.l.b16 %v97
    %v153 = vunpack.c.l.b16 %v98
    %v154 = vpack.c.b16 %v139, %v138
    %v155 = vpack.c.b16 %v141, %v140
    %v156 = vpack.c.b16 %v143, %v142
    %v157 = vpack.c.b16 %v145, %v144
    %v158 = vpack.c.b16 %v147, %v146
    %v159 = vpack.c.b16 %v149, %v148
    %v160 = vpack.c.b16 %v151, %v150
    %v161 = vpack.c.b16 %v153, %v152
    %v186 = vunpack.c.l.b16 %v99
    %v187 = vunpack.c.l.b16 %v100
    %v188 = vunpack.c.l.b16 %v101
    %v189 = vunpack.c.l.b16 %v102
    %v190 = vunpack.c.l.b16 %v103
    %v191 = vunpack.c.l.b16 %v104
    %v192 = vunpack.c.l.b16 %v105
    %v193 = vunpack.c.l.b16 %v106
    %v194 = vunpack.c.l.b16 %v107
    %v195 = vunpack.c.l.b16 %v108
    %v196 = vunpack.c.l.b16 %v109
    %v197 = vunpack.c.l.b16 %v110
    %v198 = vunpack.c.l.b16 %v111
    %v199 = vunpack.c.l.b16 %v112
    %v200 = vunpack.c.l.b16 %v113
    %v201 = vunpack.c.l.b16 %v114
    %v202 = vpack.c.b16 %v187, %v186
    %v203 = vpack.c.b16 %v189, %v188
    %v204 = vpack.c.b16 %v191, %v190
    %v205 = vpack.c.b16 %v193, %v192
    %v206 = vpack.c.b16 %v195, %v194
    %v207 = vpack.c.b16 %v197, %v196
    %v208 = vpack.c.b16 %v199, %v198
    %v209 = vpack.c.b16 %v201, %v200
    %218 = vmatprep.subr.bf16.mxu0 0
    %219 = vmatpush1.bf16.msra.mxu0 %v202
    %220 = vmatprep.subr.bf16.mxu0 0
    %221 = vmatpush1.bf16.msra.mxu0 %v203
    %222 = vmatprep.subr.bf16.mxu0 0
    %223 = vmatpush1.bf16.msra.mxu0 %v204
    %224 = vmatprep.subr.bf16.mxu0 0
    %225 = vmatpush1.bf16.msra.mxu0 %v205
    %226 = vmatprep.subr.bf16.mxu0 0
    %227 = vmatpush1.bf16.msra.mxu0 %v206
    %228 = vmatprep.subr.bf16.mxu0 0
    %229 = vmatpush1.bf16.msra.mxu0 %v207
    %230 = vmatprep.subr.bf16.mxu0 0
    %231 = vmatpush1.bf16.msra.mxu0 %v208
    %232 = vmatprep.subr.bf16.mxu0 0
    %233 = vmatpush1.bf16.msra.mxu0 %v209
    %234 = vmatprep.subr.bf16.mxu0 0
    %235 = vmatpush1.bf16.msra.mxu0 0
    %236 = vmatprep.subr.bf16.mxu0 0
    %237 = vmatpush1.bf16.msra.mxu0 0
    %238 = vmatprep.subr.bf16.mxu0 0
    %239 = vmatpush1.bf16.msra.mxu0 0
    %240 = vmatprep.subr.bf16.mxu0 0
    %241 = vmatpush1.bf16.msra.mxu0 0
    %242 = vmatprep.subr.bf16.mxu0 0
    %243 = vmatpush1.bf16.msra.mxu0 0
    %244 = vmatprep.subr.bf16.mxu0 0
    %245 = vmatpush1.bf16.msra.mxu0 0
    %246 = vmatprep.subr.bf16.mxu0 0
    %247 = vmatpush1.bf16.msra.mxu0 0
    %248 = vmatprep.subr.bf16.mxu0 0
    %249 = vmatpush1.bf16.msra.mxu0 0
    %250 = vmatprep.mubr.bf16.mxu0 0
    %251 = vmatmul.mubr.bf16.gmra.mrb[0].mxu0 %v154
    %v252 = vpop.f32.mrb[0].mxu0
    %v253 = vadd.f32 %v120, %v252
    %v254 = vpop.f32.mrb[0].mxu0
    %v255 = vpop.f32.mrb[0].mxu0
    %v256 = vadd.f32 %v120, %v255
    %v257 = vpop.f32.mrb[0].mxu0
    %258 = vmatprep.mubr.bf16.mxu0 0
    %259 = vmatmul.mubr.bf16.gmra.mrb[0].mxu0 %v155
    %v260 = vpop.f32.mrb[0].mxu0
    %v261 = vadd.f32 %v120, %v260
    %v262 = vpop.f32.mrb[0].mxu0
    %v263 = vpop.f32.mrb[0].mxu0
    %v264 = vadd.f32 %v120, %v263
    %v265 = vpop.f32.mrb[0].mxu0
    %266 = vmatprep.mubr.bf16.mxu0 0
    %267 = vmatmul.mubr.bf16.gmra.mrb[0].mxu0 %v156
    %v268 = vpop.f32.mrb[0].mxu0
    %v269 = vadd.f32 %v120, %v268
    %v270 = vpop.f32.mrb[0].mxu0
    %v271 = vpop.f32.mrb[0].mxu0
    %v272 = vadd.f32 %v120, %v271
    %v273 = vpop.f32.mrb[0].mxu0
    %274 = vmatprep.mubr.bf16.mxu0 0
    %275 = vmatmul.mubr.bf16.gmra.mrb[0].mxu0 %v157
    %v276 = vpop.f32.mrb[0].mxu0
    %v277 = vadd.f32 %v120, %v276
    %v278 = vpop.f32.mrb[0].mxu0
    %v279 = vpop.f32.mrb[0].mxu0
    %v280 = vadd.f32 %v120, %v279
    %v281 = vpop.f32.mrb[0].mxu0
    %282 = vmatprep.mubr.bf16.mxu0 0
    %283 = vmatmul.mubr.bf16.gmra.mrb[0].mxu0 %v158
    %v284 = vpop.f32.mrb[0].mxu0
    %v285 = vadd.f32 %v120, %v284
    %v286 = vpop.f32.mrb[0].mxu0
    %v287 = vpop.f32.mrb[0].mxu0
    %v288 = vadd.f32 %v120, %v287
    %v289 = vpop.f32.mrb[0].mxu0
    %290 = vmatprep.mubr.bf16.mxu0 0
    %291 = vmatmul.mubr.bf16.gmra.mrb[0].mxu0 %v159
    %v292 = vpop.f32.mrb[0].mxu0
    %v293 = vadd.f32 %v120, %v292
    %v294 = vpop.f32.mrb[0].mxu0
    %v295 = vpop.f32.mrb[0].mxu0
    %v296 = vadd.f32 %v120, %v295
    %v297 = vpop.f32.mrb[0].mxu0
    %298 = vmatprep.mubr.bf16.mxu0 0
    %299 = vmatmul.mubr.bf16.gmra.mrb[0].mxu0 %v160
    %v300 = vpop.f32.mrb[0].mxu0
    %v301 = vadd.f32 %v120, %v300
    %v302 = vpop.f32.mrb[0].mxu0
    %v303 = vpop.f32.mrb[0].mxu0
    %v304 = vadd.f32 %v120, %v303
    %v305 = vpop.f32.mrb[0].mxu0
    %306 = vmatprep.mubr.bf16.mxu0 0
    %307 = vmatmul.mubr.bf16.gmra.mrb[0].mxu0 %v161
    %v308 = vpop.f32.mrb[0].mxu0
    %v309 = vadd.f32 %v120, %v308
    %v310 = vpop.f32.mrb[0].mxu0
    %v311 = vpop.f32.mrb[0].mxu0
    %v312 = vadd.f32 %v120, %v311
    %v313 = vpop.f32.mrb[0].mxu0
    %314 = vdwg.mxu0
    %v315 = vmax.f32 %v253, 0.0
    %v316 = vmax.f32 %v256, 0.0
    %v317 = vmax.f32 %v261, 0.0
    %v318 = vmax.f32 %v264, 0.0
    %v319 = vmax.f32 %v269, 0.0
    %v320 = vmax.f32 %v272, 0.0
    %v321 = vmax.f32 %v277, 0.0
    %v322 = vmax.f32 %v280, 0.0
    %v323 = vmax.f32 %v285, 0.0
    %v324 = vmax.f32 %v288, 0.0
    %v325 = vmax.f32 %v293, 0.0
    %v326 = vmax.f32 %v296, 0.0
    %v327 = vmax.f32 %v301, 0.0
    %v328 = vmax.f32 %v304, 0.0
    %v329 = vmax.f32 %v309, 0.0
    %v330 = vmax.f32 %v312, 0.0
    %v331 = vpack.c.bf16 %v316, %v315
    %v332 = vpack.c.bf16 %v318, %v317
    %v333 = vpack.c.bf16 %v320, %v319
    %v334 = vpack.c.bf16 %v322, %v321
    %v335 = vpack.c.bf16 %v324, %v323
    %v336 = vpack.c.bf16 %v326, %v325
    %v337 = vpack.c.bf16 %v328, %v327
    %v338 = vpack.c.bf16 %v330, %v329
    %v339 = vld [vmem:[#allocation7] sm:$0xf]
    %v340 = vld [vmem:[#allocation7 + $0x4] sm:$0xf]
    %v341 = vld [vmem:[#allocation7 + $0x8] sm:$0xf]
    %v342 = vld [vmem:[#allocation7 + $0xc] sm:$0xf]
    %v343 = vld [vmem:[#allocation7 + $0x10] sm:$0xf]
    %v344 = vld [vmem:[#allocation7 + $0x14] sm:$0xf]
    %v345 = vld [vmem:[#allocation7 + $0x18] sm:$0xf]
    %v346 = vld [vmem:[#allocation7 + $0x1c] sm:$0xf]
    %v347 = vld [vmem:[#allocation7 + $0x20] sm:$0xf]
    %v348 = vld [vmem:[#allocation7 + $0x24] sm:$0xf]
    %v349 = vld [vmem:[#allocation7 + $0x28] sm:$0xf]
    %v350 = vld [vmem:[#allocation7 + $0x2c] sm:$0xf]
    %v351 = vld [vmem:[#allocation7 + $0x30] sm:$0xf]
    %v352 = vld [vmem:[#allocation7 + $0x34] sm:$0xf]
    %v353 = vld [vmem:[#allocation7 + $0x38] sm:$0xf]
    %v354 = vld [vmem:[#allocation7 + $0x3c] sm:$0xf]
    %v355 = vld [vmem:[%s4] sm:$0x1]
    %v357 = vlaneseq
    %v358 = vshrl.u32 %v357, 7
    %v359 = vsub.s32 0, %v358
    %v360 = vrot.slane %v355, %v359
    %v378 = vunpack.c.l.b16 %v339
    %v379 = vunpack.c.l.b16 %v340
    %v380 = vunpack.c.l.b16 %v341
    %v381 = vunpack.c.l.b16 %v342
    %v382 = vunpack.c.l.b16 %v343
    %v383 = vunpack.c.l.b16 %v344
    %v384 = vunpack.c.l.b16 %v345
    %v385 = vunpack.c.l.b16 %v346
    %v386 = vunpack.c.l.b16 %v347
    %v387 = vunpack.c.l.b16 %v348
    %v388 = vunpack.c.l.b16 %v349
    %v389 = vunpack.c.l.b16 %v350
    %v390 = vunpack.c.l.b16 %v351
    %v391 = vunpack.c.l.b16 %v352
    %v392 = vunpack.c.l.b16 %v353
    %v393 = vunpack.c.l.b16 %v354
    %v394 = vpack.c.b16 %v379, %v378
    %v395 = vpack.c.b16 %v381, %v380
    %v396 = vpack.c.b16 %v383, %v382
    %v397 = vpack.c.b16 %v385, %v384
    %v398 = vpack.c.b16 %v387, %v386
    %v399 = vpack.c.b16 %v389, %v388
    %v400 = vpack.c.b16 %v391, %v390
    %v401 = vpack.c.b16 %v393, %v392
    %410 = vmatprep.subr.bf16.mxu0 0
    %411 = vmatpush1.bf16.msra.mxu0 %v394
    %412 = vmatprep.subr.bf16.mxu0 0
    %413 = vmatpush1.bf16.msra.mxu0 %v395
    %414 = vmatprep.subr.bf16.mxu0 0
    %415 = vmatpush1.bf16.msra.mxu0 %v396
    %416 = vmatprep.subr.bf16.mxu0 0
    %417 = vmatpush1.bf16.msra.mxu0 %v397
    %418 = vmatprep.subr.bf16.mxu0 0
    %419 = vmatpush1.bf16.msra.mxu0 %v398
    %420 = vmatprep.subr.bf16.mxu0 0
    %421 = vmatpush1.bf16.msra.mxu0 %v399
    %422 = vmatprep.subr.bf16.mxu0 0
    %423 = vmatpush1.bf16.msra.mxu0 %v400
    %424 = vmatprep.subr.bf16.mxu0 0
    %425 = vmatpush1.bf16.msra.mxu0 %v401
    %426 = vmatprep.subr.bf16.mxu0 0
    %427 = vmatpush1.bf16.msra.mxu0 0
    %428 = vmatprep.subr.bf16.mxu0 0
    %429 = vmatpush1.bf16.msra.mxu0 0
    %430 = vmatprep.subr.bf16.mxu0 0
    %431 = vmatpush1.bf16.msra.mxu0 0
    %432 = vmatprep.subr.bf16.mxu0 0
    %433 = vmatpush1.bf16.msra.mxu0 0
    %434 = vmatprep.subr.bf16.mxu0 0
    %435 = vmatpush1.bf16.msra.mxu0 0
    %436 = vmatprep.subr.bf16.mxu0 0
    %437 = vmatpush1.bf16.msra.mxu0 0
    %438 = vmatprep.subr.bf16.mxu0 0
    %439 = vmatpush1.bf16.msra.mxu0 0
    %440 = vmatprep.subr.bf16.mxu0 0
    %441 = vmatpush1.bf16.msra.mxu0 0
    %442 = vmatprep.mubr.bf16.mxu0 0
    %443 = vmatmul.mubr.bf16.gmra.mrb[0].mxu0 %v331
    %v444 = vpop.f32.mrb[0].mxu0
    %v445 = vadd.f32 %v360, %v444
    %v446 = vpop.f32.mrb[0].mxu0
    %v447 = vpop.f32.mrb[0].mxu0
    %v448 = vadd.f32 %v360, %v447
    %v449 = vpop.f32.mrb[0].mxu0
    %450 = vmatprep.mubr.bf16.mxu0 0
    %451 = vmatmul.mubr.bf16.gmra.mrb[0].mxu0 %v332
    %v452 = vpop.f32.mrb[0].mxu0
    %v453 = vadd.f32 %v360, %v452
    %v454 = vpop.f32.mrb[0].mxu0
    %v455 = vpop.f32.mrb[0].mxu0
    %v456 = vadd.f32 %v360, %v455
    %v457 = vpop.f32.mrb[0].mxu0
    %458 = vmatprep.mubr.bf16.mxu0 0
    %459 = vmatmul.mubr.bf16.gmra.mrb[0].mxu0 %v333
    %v460 = vpop.f32.mrb[0].mxu0
    %v461 = vadd.f32 %v360, %v460
    %v462 = vpop.f32.mrb[0].mxu0
    %v463 = vpop.f32.mrb[0].mxu0
    %v464 = vadd.f32 %v360, %v463
    %v465 = vpop.f32.mrb[0].mxu0
    %466 = vmatprep.mubr.bf16.mxu0 0
    %467 = vmatmul.mubr.bf16.gmra.mrb[0].mxu0 %v334
    %v468 = vpop.f32.mrb[0].mxu0
    %v469 = vadd.f32 %v360, %v468
    %v470 = vpop.f32.mrb[0].mxu0
    %v471 = vpop.f32.mrb[0].mxu0
    %v472 = vadd.f32 %v360, %v471
    %v473 = vpop.f32.mrb[0].mxu0
    %474 = vmatprep.mubr.bf16.mxu0 0
    %475 = vmatmul.mubr.bf16.gmra.mrb[0].mxu0 %v335
    %v476 = vpop.f32.mrb[0].mxu0
    %v477 = vadd.f32 %v360, %v476
    %v478 = vpop.f32.mrb[0].mxu0
    %v479 = vpop.f32.mrb[0].mxu0
    %v480 = vadd.f32 %v360, %v479
    %v481 = vpop.f32.mrb[0].mxu0
    %482 = vmatprep.mubr.bf16.mxu0 0
    %483 = vmatmul.mubr.bf16.gmra.mrb[0].mxu0 %v336
    %v484 = vpop.f32.mrb[0].mxu0
    %v485 = vadd.f32 %v360, %v484
    %v486 = vpop.f32.mrb[0].mxu0
    %v487 = vpop.f32.mrb[0].mxu0
    %v488 = vadd.f32 %v360, %v487
    %v489 = vpop.f32.mrb[0].mxu0
    %490 = vmatprep.mubr.bf16.mxu0 0
    %491 = vmatmul.mubr.bf16.gmra.mrb[0].mxu0 %v337
    %v492 = vpop.f32.mrb[0].mxu0
    %v493 = vadd.f32 %v360, %v492
    %v494 = vpop.f32.mrb[0].mxu0
    %v495 = vpop.f32.mrb[0].mxu0
    %v496 = vadd.f32 %v360, %v495
    %v497 = vpop.f32.mrb[0].mxu0
    %498 = vmatprep.mubr.bf16.mxu0 0
    %499 = vmatmul.mubr.bf16.gmra.mrb[0].mxu0 %v338
    %v500 = vpop.f32.mrb[0].mxu0
    %v501 = vadd.f32 %v360, %v500
    %v502 = vpop.f32.mrb[0].mxu0
    %v503 = vpop.f32.mrb[0].mxu0
    %v504 = vadd.f32 %v360, %v503
    %v505 = vpop.f32.mrb[0].mxu0
    %506 = vdwg.mxu0
    %v507 = vmax.f32 %v445, 0.0
    %v508 = vmax.f32 %v448, 0.0
    %v509 = vmax.f32 %v453, 0.0
    %v510 = vmax.f32 %v456, 0.0
    %v511 = vmax.f32 %v461, 0.0
    %v512 = vmax.f32 %v464, 0.0
    %v513 = vmax.f32 %v469, 0.0
    %v514 = vmax.f32 %v472, 0.0
    %v515 = vmax.f32 %v477, 0.0
    %v516 = vmax.f32 %v480, 0.0
    %v517 = vmax.f32 %v485, 0.0
    %v518 = vmax.f32 %v488, 0.0
    %v519 = vmax.f32 %v493, 0.0
    %v520 = vmax.f32 %v496, 0.0
    %v521 = vmax.f32 %v501, 0.0
    %v522 = vmax.f32 %v504, 0.0
    %v523 = vpack.c.bf16 %v508, %v507
    %v524 = vpack.c.bf16 %v510, %v509
    %v525 = vpack.c.bf16 %v512, %v511
    %v526 = vpack.c.bf16 %v514, %v513
    %v527 = vpack.c.bf16 %v516, %v515
    %v528 = vpack.c.bf16 %v518, %v517
    %v529 = vpack.c.bf16 %v520, %v519
    %v530 = vpack.c.bf16 %v522, %v521
    %v531 = vld [vmem:[#allocation8] sm:$0xf]
    %v532 = vld [vmem:[#allocation8 + $0x4] sm:$0xf]
    %v533 = vld [vmem:[#allocation8 + $0x8] sm:$0xf]
    %v534 = vld [vmem:[#allocation8 + $0xc] sm:$0xf]
    %v535 = vld [vmem:[#allocation8 + $0x10] sm:$0xf]
    %v536 = vld [vmem:[#allocation8 + $0x14] sm:$0xf]
    %v537 = vld [vmem:[#allocation8 + $0x18] sm:$0xf]
    %v538 = vld [vmem:[#allocation8 + $0x1c] sm:$0xf]
    %v539 = vld [vmem:[#allocation8 + $0x20] sm:$0xf]
    %v540 = vld [vmem:[#allocation8 + $0x24] sm:$0xf]
    %v541 = vld [vmem:[#allocation8 + $0x28] sm:$0xf]
    %v542 = vld [vmem:[#allocation8 + $0x2c] sm:$0xf]
    %v543 = vld [vmem:[#allocation8 + $0x30] sm:$0xf]
    %v544 = vld [vmem:[#allocation8 + $0x34] sm:$0xf]
    %v545 = vld [vmem:[#allocation8 + $0x38] sm:$0xf]
    %v546 = vld [vmem:[#allocation8 + $0x3c] sm:$0xf]
    %v547 = vld [vmem:[%s6] sm:$0x1]
    %v549 = vlaneseq
    %v550 = vshrl.u32 %v549, 7
    %v551 = vsub.s32 0, %v550
    %v552 = vrot.slane %v547, %v551
    %v570 = vunpack.c.l.b16 %v531
    %v571 = vunpack.c.l.b16 %v532
    %v572 = vunpack.c.l.b16 %v533
    %v573 = vunpack.c.l.b16 %v534
    %v574 = vunpack.c.l.b16 %v535
    %v575 = vunpack.c.l.b16 %v536
    %v576 = vunpack.c.l.b16 %v537
    %v577 = vunpack.c.l.b16 %v538
    %v578 = vunpack.c.l.b16 %v539
    %v579 = vunpack.c.l.b16 %v540
    %v580 = vunpack.c.l.b16 %v541
    %v581 = vunpack.c.l.b16 %v542
    %v582 = vunpack.c.l.b16 %v543
    %v583 = vunpack.c.l.b16 %v544
    %v584 = vunpack.c.l.b16 %v545
    %v585 = vunpack.c.l.b16 %v546
    %v586 = vpack.c.b16 %v571, %v570
    %v587 = vpack.c.b16 %v573, %v572
    %v588 = vpack.c.b16 %v575, %v574
    %v589 = vpack.c.b16 %v577, %v576
    %v590 = vpack.c.b16 %v579, %v578
    %v591 = vpack.c.b16 %v581, %v580
    %v592 = vpack.c.b16 %v583, %v582
    %v593 = vpack.c.b16 %v585, %v584
    %602 = vmatprep.subr.bf16.mxu0 0
    %603 = vmatpush1.bf16.msra.mxu0 %v586
    %604 = vmatprep.subr.bf16.mxu0 0
    %605 = vmatpush1.bf16.msra.mxu0 %v587
    %606 = vmatprep.subr.bf16.mxu0 0
    %607 = vmatpush1.bf16.msra.mxu0 %v588
    %608 = vmatprep.subr.bf16.mxu0 0
    %609 = vmatpush1.bf16.msra.mxu0 %v589
    %610 = vmatprep.subr.bf16.mxu0 0
    %611 = vmatpush1.bf16.msra.mxu0 %v590
    %612 = vmatprep.subr.bf16.mxu0 0
    %613 = vmatpush1.bf16.msra.mxu0 %v591
    %614 = vmatprep.subr.bf16.mxu0 0
    %615 = vmatpush1.bf16.msra.mxu0 %v592
    %616 = vmatprep.subr.bf16.mxu0 0
    %617 = vmatpush1.bf16.msra.mxu0 %v593
    %618 = vmatprep.subr.bf16.mxu0 0
    %619 = vmatpush1.bf16.msra.mxu0 0
    %620 = vmatprep.subr.bf16.mxu0 0
    %621 = vmatpush1.bf16.msra.mxu0 0
    %622 = vmatprep.subr.bf16.mxu0 0
    %623 = vmatpush1.bf16.msra.mxu0 0
    %624 = vmatprep.subr.bf16.mxu0 0
    %625 = vmatpush1.bf16.msra.mxu0 0
    %626 = vmatprep.subr.bf16.mxu0 0
    %627 = vmatpush1.bf16.msra.mxu0 0
    %628 = vmatprep.subr.bf16.mxu0 0
    %629 = vmatpush1.bf16.msra.mxu0 0
    %630 = vmatprep.subr.bf16.mxu0 0
    %631 = vmatpush1.bf16.msra.mxu0 0
    %632 = vmatprep.subr.bf16.mxu0 0
    %633 = vmatpush1.bf16.msra.mxu0 0
    %634 = vmatprep.mubr.bf16.mxu0 0
    %635 = vmatmul.mubr.bf16.gmra.mrb[0].mxu0 %v523
    %v636 = vpop.f32.mrb[0].mxu0
    %v637 = vadd.f32 %v552, %v636
    %v638 = vpop.f32.mrb[0].mxu0
    %v639 = vpop.f32.mrb[0].mxu0
    %v640 = vadd.f32 %v552, %v639
    %v641 = vpop.f32.mrb[0].mxu0
    %642 = vmatprep.mubr.bf16.mxu0 0
    %643 = vmatmul.mubr.bf16.gmra.mrb[0].mxu0 %v524
    %v644 = vpop.f32.mrb[0].mxu0
    %v645 = vadd.f32 %v552, %v644
    %v646 = vpop.f32.mrb[0].mxu0
    %v647 = vpop.f32.mrb[0].mxu0
    %v648 = vadd.f32 %v552, %v647
    %v649 = vpop.f32.mrb[0].mxu0
    %650 = vmatprep.mubr.bf16.mxu0 0
    %651 = vmatmul.mubr.bf16.gmra.mrb[0].mxu0 %v525
    %v652 = vpop.f32.mrb[0].mxu0
    %v653 = vadd.f32 %v552, %v652
    %v654 = vpop.f32.mrb[0].mxu0
    %v655 = vpop.f32.mrb[0].mxu0
    %v656 = vadd.f32 %v552, %v655
    %v657 = vpop.f32.mrb[0].mxu0
    %658 = vmatprep.mubr.bf16.mxu0 0
    %659 = vmatmul.mubr.bf16.gmra.mrb[0].mxu0 %v526
    %v660 = vpop.f32.mrb[0].mxu0
    %v661 = vadd.f32 %v552, %v660
    %v662 = vpop.f32.mrb[0].mxu0
    %v663 = vpop.f32.mrb[0].mxu0
    %v664 = vadd.f32 %v552, %v663
    %v665 = vpop.f32.mrb[0].mxu0
    %666 = vmatprep.mubr.bf16.mxu0 0
    %667 = vmatmul.mubr.bf16.gmra.mrb[0].mxu0 %v527
    %v668 = vpop.f32.mrb[0].mxu0
    %v669 = vadd.f32 %v552, %v668
    %v670 = vpop.f32.mrb[0].mxu0
    %v671 = vpop.f32.mrb[0].mxu0
    %v672 = vadd.f32 %v552, %v671
    %v673 = vpop.f32.mrb[0].mxu0
    %674 = vmatprep.mubr.bf16.mxu0 0
    %675 = vmatmul.mubr.bf16.gmra.mrb[0].mxu0 %v528
    %v676 = vpop.f32.mrb[0].mxu0
    %v677 = vadd.f32 %v552, %v676
    %v678 = vpop.f32.mrb[0].mxu0
    %v679 = vpop.f32.mrb[0].mxu0
    %v680 = vadd.f32 %v552, %v679
    %v681 = vpop.f32.mrb[0].mxu0
    %682 = vmatprep.mubr.bf16.mxu0 0
    %683 = vmatmul.mubr.bf16.gmra.mrb[0].mxu0 %v529
    %v684 = vpop.f32.mrb[0].mxu0
    %v685 = vadd.f32 %v552, %v684
    %v686 = vpop.f32.mrb[0].mxu0
    %v687 = vpop.f32.mrb[0].mxu0
    %v688 = vadd.f32 %v552, %v687
    %v689 = vpop.f32.mrb[0].mxu0
    %690 = vmatprep.mubr.bf16.mxu0 0
    %691 = vmatmul.mubr.bf16.gmra.mrb[0].mxu0 %v530
    %v692 = vpop.f32.mrb[0].mxu0
    %v693 = vadd.f32 %v552, %v692
    %v694 = vpop.f32.mrb[0].mxu0
    %v695 = vpop.f32.mrb[0].mxu0
    %v696 = vadd.f32 %v552, %v695
    %v697 = vpop.f32.mrb[0].mxu0
    %698 = vdwg.mxu0
    %v699 = vsub.f32 0.0, %v637
    %v700 = vsub.f32 0.0, %v640
    %v701 = vsub.f32 0.0, %v645
    %v702 = vsub.f32 0.0, %v648
    %v703 = vsub.f32 0.0, %v653
    %v704 = vsub.f32 0.0, %v656
    %v705 = vsub.f32 0.0, %v661
    %v706 = vsub.f32 0.0, %v664
    %v707 = vsub.f32 0.0, %v669
    %v708 = vsub.f32 0.0, %v672
    %v709 = vsub.f32 0.0, %v677
    %v710 = vsub.f32 0.0, %v680
    %v711 = vsub.f32 0.0, %v685
    %v712 = vsub.f32 0.0, %v688
    %v713 = vsub.f32 0.0, %v693
    %v714 = vsub.f32 0.0, %v696
    %v715 = vmul.f32 %v699, 1.442695
    %v716 = vpow.pop %v715
    %v717 = vmul.f32 %v700, 1.442695
    %v718 = vpow.pop %v717
    %v719 = vmul.f32 %v701, 1.442695
    %v720 = vpow.pop %v719
    %v721 = vmul.f32 %v702, 1.442695
    %v722 = vpow.pop %v721
    %v723 = vmul.f32 %v703, 1.442695
    %v724 = vpow.pop %v723
    %v725 = vmul.f32 %v704, 1.442695
    %v726 = vpow.pop %v725
    %v727 = vmul.f32 %v705, 1.442695
    %v728 = vpow.pop %v727
    %v729 = vmul.f32 %v706, 1.442695
    %v730 = vpow.pop %v729
    %v731 = vmul.f32 %v707, 1.442695
    %v732 = vpow.pop %v731
    %v733 = vmul.f32 %v708, 1.442695
    %v734 = vpow.pop %v733
    %v735 = vmul.f32 %v709, 1.442695
    %v736 = vpow.pop %v735
    %v737 = vmul.f32 %v710, 1.442695
    %v738 = vpow.pop %v737
    %v739 = vmul.f32 %v711, 1.442695
    %v740 = vpow.pop %v739
    %v741 = vmul.f32 %v712, 1.442695
    %v742 = vpow.pop %v741
    %v743 = vmul.f32 %v713, 1.442695
    %v744 = vpow.pop %v743
    %v745 = vmul.f32 %v714, 1.442695
    %v746 = vpow.pop %v745
    %v747 = vadd.f32 %v716, 1.0
    %v748 = vadd.f32 %v718, 1.0
    %v749 = vadd.f32 %v720, 1.0
    %v750 = vadd.f32 %v722, 1.0
    %v751 = vadd.f32 %v724, 1.0
    %v752 = vadd.f32 %v726, 1.0
    %v753 = vadd.f32 %v728, 1.0
    %v754 = vadd.f32 %v730, 1.0
    %v755 = vadd.f32 %v732, 1.0
    %v756 = vadd.f32 %v734, 1.0
    %v757 = vadd.f32 %v736, 1.0
    %v758 = vadd.f32 %v738, 1.0
    %v759 = vadd.f32 %v740, 1.0
    %v760 = vadd.f32 %v742, 1.0
    %v761 = vadd.f32 %v744, 1.0
    %v762 = vadd.f32 %v746, 1.0
    %v763 = vrcp.pop %v747
    %v764 = vrcp.pop %v748
    %v765 = vrcp.pop %v749
    %v766 = vrcp.pop %v750
    %v767 = vrcp.pop %v751
    %v768 = vrcp.pop %v752
    %v769 = vrcp.pop %v753
    %v770 = vrcp.pop %v754
    %v771 = vrcp.pop %v755
    %v772 = vrcp.pop %v756
    %v773 = vrcp.pop %v757
    %v774 = vrcp.pop %v758
    %v775 = vrcp.pop %v759
    %v776 = vrcp.pop %v760
    %v777 = vrcp.pop %v761
    %v778 = vrcp.pop %v762
    %779 = vst [vmem:[#allocation10] sm:$0xff] %v763
    %780 = vst [vmem:[#allocation10 + $0x8] sm:$0xff] %v764
    %781 = vst [vmem:[#allocation10 + $0x10] sm:$0xff] %v765
    %782 = vst [vmem:[#allocation10 + $0x18] sm:$0xff] %v766
    %783 = vst [vmem:[#allocation10 + $0x20] sm:$0xff] %v767
    %784 = vst [vmem:[#allocation10 + $0x28] sm:$0xff] %v768
    %785 = vst [vmem:[#allocation10 + $0x30] sm:$0xff] %v769
    %786 = vst [vmem:[#allocation10 + $0x38] sm:$0xff] %v770
    %787 = vst [vmem:[#allocation10 + $0x40] sm:$0xff] %v771
    %788 = vst [vmem:[#allocation10 + $0x48] sm:$0xff] %v772
    %789 = vst [vmem:[#allocation10 + $0x50] sm:$0xff] %v773
    %790 = vst [vmem:[#allocation10 + $0x58] sm:$0xff] %v774
    %791 = vst [vmem:[#allocation10 + $0x60] sm:$0xff] %v775
    %792 = vst [vmem:[#allocation10 + $0x68] sm:$0xff] %v776
    %793 = vst [vmem:[#allocation10 + $0x70] sm:$0xff] %v777
    %794 = vst [vmem:[#allocation10 + $0x78] sm:$0xff] %v778
    // Predicated region
    $region46: #{_fused_mlp_padded.1} parent=1 // pred_check
      _
    $region47: #{_fused_mlp_padded.1} parent=1 // pred_check_branch
      %796 = sbr.rel (0) target = $region49
    $region48: #{_fused_mlp_padded.1} parent=1 // pred_region
      %s798 = ssub.s32 2048, 2048
      %799 = vsyncadd [#allocation4], %s798
      %s800 = sshll.u32 [#allocation10], 4
      %s801 = int_to_ptr.vmem [resolvable:$true] %s800
      %806 = dma.vmem_to_hbm [thread:$0]  %s801, 2048, %s7, [#allocation4], 128, 128, 8
    $region49: #{_fused_mlp_padded.1} parent=1 // pred_fallthru
      _
    // Predicated region
    $region50: #{_fused_mlp_padded.1} parent=1 // pred_check
      _
    $region51: #{_fused_mlp_padded.1} parent=1 // pred_check_branch
      %808 = sbr.rel (0) target = $region53
    $region52: #{_fused_mlp_padded.1} parent=1 // pred_region
      %809 = dma.done [#allocation4], 2048
    $region53: #{_fused_mlp_padded.1} parent=1 // pred_fallthru
      _
    %810 = vsyncpa [#allocation3], 1
    %811 = vsyncpa [#allocation6], 1
    %812 = vsyncpa [#allocation9], 1
    %813 = vsyncpa [#allocation4], 1

</llo_original>
